<compile_context>
chip_gen: v7x
topology: tpu7x:2x2x1
jax: 0.10.0
libtpu: 0.0.40
codegen_flags: <defaults>
</compile_context>

<pallas_src>
import jax
import jax.numpy as jnp
from jax.experimental import pallas as pl
from jax.experimental.pallas import tpu as pltpu

NEG_SLOPE = 0.2        # GATConv default LeakyReLU negative_slope
MASK_SCALE = 1e30


def _round_up(a, b):
    return (a + b - 1) // b * b


def _choose_tiling(n):
    """Pick (dst_tile, padded_N).  Small graphs run as a single block."""
    if n <= 512:
        tile = max(8, _round_up(n, 8))
        return tile, tile
    tile = 512
    n_pad = _round_up(n, tile)
    # Keep the double-buffered bf16 mask tile well under the v7x VMEM budget.
    while tile > 64 and 2 * tile * n_pad * 2 > (24 << 20):
        tile //= 2          # tile keeps dividing 512, so n_pad stays aligned
    return tile, n_pad


# ---------------------------------------------------------------------------
# Kernel 1: projection.  h = x @ W and fused attention scalars a = h @ att_cat
# ---------------------------------------------------------------------------
def _proj_kernel(x_ref, w_ref, att_ref, h_ref, a_ref):
    xb = x_ref[...].astype(jnp.bfloat16)
    wb = w_ref[...].astype(jnp.bfloat16)
    h = jnp.dot(xb, wb, preferred_element_type=jnp.float32)           # (T, H*F)
    a = jnp.dot(h.astype(jnp.bfloat16), att_ref[...],
                preferred_element_type=jnp.float32)                    # (T, 2H)
    h_ref[...] = h.astype(jnp.bfloat16)
    a_ref[...] = a


def _project(x, w, att_cat, *, tile):
    n_pad, din = x.shape
    hf = w.shape[1]
    two_h = att_cat.shape[1]
    return pl.pallas_call(
        _proj_kernel,
        out_shape=(jax.ShapeDtypeStruct((n_pad, hf), jnp.bfloat16),
                   jax.ShapeDtypeStruct((n_pad, two_h), jnp.float32)),
        grid=(n_pad // tile,),
        in_specs=[pl.BlockSpec((tile, din), lambda i: (i, 0)),
                  pl.BlockSpec((din, hf), lambda i: (0, 0)),
                  pl.BlockSpec((hf, two_h), lambda i: (0, 0))],
        out_specs=(pl.BlockSpec((tile, hf), lambda i: (i, 0)),
                   pl.BlockSpec((tile, two_h), lambda i: (i, 0))),
        compiler_params=pltpu.CompilerParams(
            dimension_semantics=("parallel",)),
    )(x, w, att_cat.astype(jnp.bfloat16))


# ---------------------------------------------------------------------------
# Kernel 2: masked multi-head attention over one destination-node tile.
# ---------------------------------------------------------------------------
def _make_attn_kernel(heads, fdim, activation):
    def kernel(adst_ref, asrct_ref, mask_ref, h_ref, bias_ref, out_ref):
        a_dst = adst_ref[...]                            # (T, H)   f32
        a_src_row = asrct_ref[...]                       # (H, N)   f32 (pre-T'd)
        mask = mask_ref[...].astype(jnp.float32)         # (T, N)   0 / -1e30
        h = h_ref[...]                                   # (N, H*F) bf16

        for hd in range(heads):                          # static, unrolled
            # e[i, j] = LeakyReLU(a_dst[i] + a_src[j]) for edge j -> i
            raw = a_dst[:, hd:hd + 1] + a_src_row[hd:hd + 1, :]       # (T, N)
            raw = jnp.where(raw >= 0.0, raw, NEG_SLOPE * raw)
            logits = raw + mask                          # masking = single add
            m = jnp.max(logits, axis=-1, keepdims=True)
            p = jnp.exp(logits - m)
            s = jnp.sum(p, axis=-1, keepdims=True)
            attn = p * pl.reciprocal(s, approx=True)     # EUP, off the VALU
            hv = h[:, hd * fdim:(hd + 1) * fdim]                       # (N, F)
            out_ref[:, hd * fdim:(hd + 1) * fdim] = jnp.dot(
                attn.astype(jnp.bfloat16), hv,
                preferred_element_type=jnp.float32)      # static-slice write

        out = out_ref[...] + bias_ref[...]               # bias (1, H*F)
        if activation == "relu":
            out = jnp.maximum(out, 0.0)
        elif activation == "log_softmax":                # over dim=1 (classes)
            mx = jnp.max(out, axis=1, keepdims=True)
            z = out - mx
            out = z - jnp.log(jnp.sum(jnp.exp(z), axis=1, keepdims=True))
        out_ref[...] = out

    return kernel


def _attention(a_dst, a_src_t, mask_bias, h, bias2d, *, heads, fdim,
               activation, tile):
    n_pad = h.shape[0]
    hf = heads * fdim
    # Explicit VMEM budget: double-buffered per-tile blocks + resident h/a_src.
    vmem_bytes = (2 * tile * n_pad * 2        # mask tile (bf16), 2 buffers
                  + 2 * tile * heads * 4      # a_dst tile
                  + 2 * n_pad * hf * 2        # resident h (bf16)
                  + 2 * heads * n_pad * 4     # resident a_src^T
                  + 2 * tile * hf * 4         # output tile
                  + (4 << 20))
    vmem_bytes = int(min(max(vmem_bytes, 16 << 20), 100 << 20))
    cost = pl.CostEstimate(
        flops=2 * n_pad * n_pad * heads * (fdim + 4),
        transcendentals=n_pad * n_pad * heads,
        bytes_accessed=n_pad * n_pad * 2 + n_pad * hf * 6)

    return pl.pallas_call(
        _make_attn_kernel(heads, fdim, activation),
        out_shape=jax.ShapeDtypeStruct((n_pad, hf), jnp.float32),
        grid=(n_pad // tile,),
        in_specs=[pl.BlockSpec((tile, heads), lambda i: (i, 0)),   # a_dst
                  pl.BlockSpec((heads, n_pad), lambda i: (0, 0)),  # a_src^T
                  pl.BlockSpec((tile, n_pad), lambda i: (i, 0)),   # mask bias
                  pl.BlockSpec((n_pad, hf), lambda i: (0, 0)),     # h (resident)
                  pl.BlockSpec((1, hf), lambda i: (0, 0))],        # bias
        out_specs=pl.BlockSpec((tile, hf), lambda i: (i, 0)),
        compiler_params=pltpu.CompilerParams(
            dimension_semantics=("parallel",),
            vmem_limit_bytes=vmem_bytes),
        cost_estimate=cost,
    )(a_dst, a_src_t, mask_bias, h, bias2d)


# ---------------------------------------------------------------------------
# Layer + network wrappers (plain-JAX glue)
# ---------------------------------------------------------------------------
def gat_layer(x, w, att_src, att_dst, bias, mask_bias, *, heads, out_per_head,
              activation, tile):
    hf = heads * out_per_head
    # Fused (H*F, 2H) selection matrix: columns [0:H)=src, [H:2H)=dst, so both
    # per-head attention scalars come out of ONE in-kernel matmul.
    rows = jnp.arange(hf)
    cols = jnp.repeat(jnp.arange(heads), out_per_head)
    att_cat = jnp.zeros((hf, 2 * heads), jnp.float32)
    att_cat = att_cat.at[rows, cols].set(att_src.reshape(-1).astype(jnp.float32))
    att_cat = att_cat.at[rows, cols + heads].set(
        att_dst.reshape(-1).astype(jnp.float32))

    h, a = _project(x.astype(jnp.float32), w.astype(jnp.float32), att_cat,
                    tile=tile)
    a_src_t = a[:, :heads].T             # hoisted transpose -> (H, N_pad)
    a_dst = a[:, heads:]                 # (N_pad, H)
    bias2d = bias.reshape(1, hf).astype(jnp.float32)
    return _attention(a_dst, a_src_t, mask_bias, h, bias2d, heads=heads,
                      fdim=out_per_head, activation=activation, tile=tile)


def build_mask_bias(edge_index, num_nodes, n_pad):
    """Dense bf16 mask bias: 0 for edge src->dst (+ self-loops), -1e30 else."""
    adj = jnp.zeros((n_pad, n_pad), jnp.float32)
    adj = adj.at[edge_index[1], edge_index[0]].set(1.0)
    diag = jnp.arange(num_nodes)
    adj = adj.at[diag, diag].set(1.0)          # add_self_loops=True
    return ((adj - 1.0) * MASK_SCALE).astype(jnp.bfloat16)


def gatnet_forward(params, x, edge_index, num_nodes, hidden_dim, output_dim,
                   mask_bias=None, tile=None, n_pad=None):
    if tile is None or n_pad is None:
        tile, n_pad = _choose_tiling(num_nodes)
    if mask_bias is None:                      # hoistable if the graph is static
        mask_bias = build_mask_bias(edge_index, num_nodes, n_pad)

    xp = jnp.zeros((n_pad, x.shape[1]), jnp.float32).at[:num_nodes].set(
        x.astype(jnp.float32))

    # conv1: heads=8, concat=True, then ReLU
    h = gat_layer(xp, params["w1"], params["a_src1"], params["a_dst1"],
                  params["b1"], mask_bias, heads=8, out_per_head=hidden_dim,
                  activation="relu", tile=tile)
    # F.dropout(p=0.5, training=False) -> identity
    # conv2: heads=1, concat=False, then log_softmax(dim=1)
    out = gat_layer(h, params["w2"], params["a_src2"], params["a_dst2"],
                    params["b2"], mask_bias, heads=1, out_per_head=output_dim,
                    activation="log_softmax", tile=tile)
    return out[:num_nodes]


def init_params(key, input_dim, hidden_dim, output_dim):
    ks = jax.random.split(key, 8)
    scale = 0.1
    return {
        # conv1: in=input_dim, out=hidden_dim, heads=8
        "w1": scale * jax.random.normal(ks[0], (input_dim, 8 * hidden_dim), jnp.float32),
        "a_src1": scale * jax.random.normal(ks[1], (8, hidden_dim), jnp.float32),
        "a_dst1": scale * jax.random.normal(ks[2], (8, hidden_dim), jnp.float32),
        "b1": scale * jax.random.normal(ks[3], (8 * hidden_dim,), jnp.float32),
        # conv2: in=8*hidden_dim, out=output_dim, heads=1, concat=False
        "w2": scale * jax.random.normal(ks[4], (8 * hidden_dim, output_dim), jnp.float32),
        "a_src2": scale * jax.random.normal(ks[5], (1, output_dim), jnp.float32),
        "a_dst2": scale * jax.random.normal(ks[6], (1, output_dim), jnp.float32),
        "b2": scale * jax.random.normal(ks[7], (output_dim,), jnp.float32),
    }


if __name__ == "__main__":
    INPUT_DIM, HIDDEN_DIM, OUTPUT_DIM = 8, 8, 4
    N_NODES, N_EDGES = 16, 40

    key = jax.random.PRNGKey(0)
    k_x, k_src, k_dst, k_p = jax.random.split(key, 4)

    x = jax.random.normal(k_x, (N_NODES, INPUT_DIM), jnp.float32)
    src = jax.random.randint(k_src, (N_EDGES,), 0, N_NODES, dtype=jnp.int32)
    dst = jax.random.randint(k_dst, (N_EDGES,), 0, N_NODES, dtype=jnp.int32)
    edge_index = jnp.stack([src, dst], axis=0)           # (2, E), COO

    params = init_params(k_p, INPUT_DIM, HIDDEN_DIM, OUTPUT_DIM)

    out = gatnet_forward(params, x, edge_index, N_NODES, HIDDEN_DIM, OUTPUT_DIM)
    out = jax.block_until_ready(out)

    assert out.shape == (N_NODES, OUTPUT_DIM)
    assert bool(jnp.all(jnp.isfinite(out)))
    # log_softmax rows should exponentiate to probabilities summing to 1
    row_sums = jnp.sum(jnp.exp(out), axis=1)
    assert bool(jnp.all(jnp.abs(row_sums - 1.0) < 1e-4))
    print("KERNEL_OK")
</pallas_src>

<mosaic_0001>
module attributes {stable_mosaic.version = 11 : i64} {
  func.func @_proj_kernel(%arg0: i32, %arg1: memref<16x8xf32, #tpu.memory_space<vmem>>, %arg2: memref<8x64xf32, #tpu.memory_space<vmem>>, %arg3: memref<64x16xbf16, #tpu.memory_space<vmem>>, %arg4: memref<16x64xbf16, #tpu.memory_space<vmem>>, %arg5: memref<16x16xf32, #tpu.memory_space<vmem>>) attributes {dimension_semantics = [#tpu.dimension_semantics<parallel>], iteration_bounds = array<i64: 1>, scalar_prefetch = 0 : i64, scratch_operands = 0 : i64, tpu.core_type = #tpu.core_type<tc>, window_params = [{transform_indices = @transform_0, window_bounds = array<i64: 16, 8>}, {pipeline_mode = #tpu.pipeline_mode<synchronous>, transform_indices = @transform_1, window_bounds = array<i64: 8, 64>}, {pipeline_mode = #tpu.pipeline_mode<synchronous>, transform_indices = @transform_2, window_bounds = array<i64: 64, 16>}, {transform_indices = @transform_3, window_bounds = array<i64: 16, 64>}, {transform_indices = @transform_4, window_bounds = array<i64: 16, 16>}]} {
    %c0 = arith.constant 0 : index
    %c0_0 = arith.constant 0 : index
    %0 = vector.load %arg1[%c0, %c0_0] : memref<16x8xf32, #tpu.memory_space<vmem>>, vector<16x8xf32>
    %1 = arith.truncf %0 : vector<16x8xf32> to vector<16x8xbf16>
    %c0_1 = arith.constant 0 : index
    %c0_2 = arith.constant 0 : index
    %2 = vector.load %arg2[%c0_1, %c0_2] : memref<8x64xf32, #tpu.memory_space<vmem>>, vector<8x64xf32>
    %3 = arith.truncf %2 : vector<8x64xf32> to vector<8x64xbf16>
    %cst = arith.constant dense<0.000000e+00> : vector<16x64xf32>
    %4 = tpu.matmul %1, %3, %cst {dimension_numbers = #tpu.dot_dimension_numbers<[1], [0], [0], [1], [0, 0, 1, 1], [], []>} : vector<16x8xbf16>, vector<8x64xbf16>, vector<16x64xf32> -> vector<16x64xf32>
    %5 = arith.truncf %4 : vector<16x64xf32> to vector<16x64xbf16>
    %c0_3 = arith.constant 0 : index
    %c0_4 = arith.constant 0 : index
    %6 = vector.load %arg3[%c0_3, %c0_4] : memref<64x16xbf16, #tpu.memory_space<vmem>>, vector<64x16xbf16>
    %cst_5 = arith.constant dense<0.000000e+00> : vector<16x16xf32>
    %7 = tpu.matmul %5, %6, %cst_5 {dimension_numbers = #tpu.dot_dimension_numbers<[1], [0], [0], [1], [0, 0, 1, 1], [], []>} : vector<16x64xbf16>, vector<64x16xbf16>, vector<16x16xf32> -> vector<16x16xf32>
    %8 = arith.truncf %4 : vector<16x64xf32> to vector<16x64xbf16>
    %c0_6 = arith.constant 0 : index
    %c0_7 = arith.constant 0 : index
    %9 = vector.load %arg4[%c0_6, %c0_7] : memref<16x64xbf16, #tpu.memory_space<vmem>>, vector<16x64xbf16>
    tpu.vector_store %arg4[%c0_6, %c0_7], %8 {strides = array<i32>} : memref<16x64xbf16, #tpu.memory_space<vmem>>, vector<16x64xbf16>,
    %c0_8 = arith.constant 0 : index
    %c0_9 = arith.constant 0 : index
    %10 = vector.load %arg5[%c0_8, %c0_9] : memref<16x16xf32, #tpu.memory_space<vmem>>, vector<16x16xf32>
    tpu.vector_store %arg5[%c0_8, %c0_9], %7 {strides = array<i32>} : memref<16x16xf32, #tpu.memory_space<vmem>>, vector<16x16xf32>,
    return
  }
  func.func @transform_0(%arg0: i32) -> (i32, i32) {
    %c0_i32 = arith.constant 0 : i32
    %c0_i32_0 = arith.constant 0 : i32
    return %arg0, %c0_i32 : i32, i32
  }
  func.func @transform_1(%arg0: i32) -> (i32, i32) {
    %c0_i32 = arith.constant 0 : i32
    %c0_i32_0 = arith.constant 0 : i32
    %c0_i32_1 = arith.constant 0 : i32
    return %c0_i32, %c0_i32_0 : i32, i32
  }
  func.func @transform_2(%arg0: i32) -> (i32, i32) {
    %c0_i32 = arith.constant 0 : i32
    %c0_i32_0 = arith.constant 0 : i32
    %c0_i32_1 = arith.constant 0 : i32
    return %c0_i32, %c0_i32_0 : i32, i32
  }
  func.func @transform_3(%arg0: i32) -> (i32, i32) {
    %c0_i32 = arith.constant 0 : i32
    %c0_i32_0 = arith.constant 0 : i32
    return %arg0, %c0_i32 : i32, i32
  }
  func.func @transform_4(%arg0: i32) -> (i32, i32) {
    %c0_i32 = arith.constant 0 : i32
    %c0_i32_0 = arith.constant 0 : i32
    return %arg0, %c0_i32 : i32, i32
  }
}

</mosaic_0001>

<llo_original>
// kernel: tpu_custom_call.1
$region0: #{tpu_custom_call.1}
  #allocation0 [shape = 'u32[]', space=smem, size = 0x4, offset = 0x4, fixed_abs, tag = 'smem constant byte address 0x4 - core index']
  #allocation1 [shape = 'u32[144,128]{1,0:T(1,128)}', space=vmem, size = 0x12000, scoped, tag = 'internal scratch']
  %s0 = inlined_call_operand.vmem [shape: f32[16,8], index: 0, kind: input, shape index: {}]
  %s1 = inlined_call_operand.vmem [shape: f32[8,64], index: 1, kind: input, shape index: {}]
  %s2 = inlined_call_operand.vmem [shape: bf16[64,16], index: 2, kind: input, shape index: {}]
  %s3 = inlined_call_operand.hbm [shape: bf16[16,64], index: 3, kind: output, shape index: {0}]
  %s4 = inlined_call_operand.hbm [shape: f32[16,16], index: 4, kind: output, shape index: {1}]
  %5 = xla_tuple %s3, %s4
  %s6 = sld [smem:[#allocation0]]
  $region30: #{tpu_custom_call.1} parent=0
    _
  %s8 = ssub.s32 1, %s6
  %s9 = scalar_select 0, %s8, %s6
  $region1: #{tpu_custom_call.1} parent=0
    #allocation2 [shape = 'u8[4096]{0}', space=vmem, size = 0x1000, scoped, tag = 'output window, operand 0, single buffered']
    #allocation3 [shape = 's32[1]{0}', space=sflag, size = 0x4, scoped, tag = 'scoped memory for tpu_custom_call.1']
    #allocation4 [shape = 'u8[8192]{0}', space=vmem, size = 0x2000, scoped, tag = 'output window, operand 1, single buffered']
    #allocation5 [shape = 's32[1]{0}', space=sflag, size = 0x4, scoped, tag = 'scoped memory for tpu_custom_call.1']
    %10 = vsyncpa [#allocation3], 0
    %11 = vsyncpa [#allocation5], 0
    // Predicated region
    $region2: #{tpu_custom_call.1} parent=1 // pred_check
      _
    $region3: #{tpu_custom_call.1} parent=1 // pred_check_branch
      %13 = sbr.rel (0) target = $region5
    $region4: #{tpu_custom_call.1} parent=1 // pred_region
      _
    $region5: #{tpu_custom_call.1} parent=1 // pred_fallthru
      _
    // Predicated region
    $region6: #{tpu_custom_call.1} parent=1 // pred_check
      _
    $region7: #{tpu_custom_call.1} parent=1 // pred_check_branch
      %15 = sbr.rel (0) target = $region9
    $region8: #{tpu_custom_call.1} parent=1 // pred_region
      _
    $region9: #{tpu_custom_call.1} parent=1 // pred_fallthru
      _
    // Predicated region
    $region10: #{tpu_custom_call.1} parent=1 // pred_check
      _
    $region11: #{tpu_custom_call.1} parent=1 // pred_check_branch
      %17 = sbr.rel (0) target = $region13
    $region12: #{tpu_custom_call.1} parent=1 // pred_region
      _
    $region13: #{tpu_custom_call.1} parent=1 // pred_fallthru
      _
    %v19 = vld [vmem:[%s0] sm:$0xff]
    %v20 = vld [vmem:[%s0 + $0x8] sm:$0xff]
    %v21 = vpack.c.bf16 %v20, %v19
    %v22 = vld [vmem:[%s1] sm:$0xff]
    %v23 = vpack.c.bf16 %v22, %v22
    %vm24 = vcmask 64512
    %v26 = vsel %vm24, %v21, 0
    %vm28 = vcmask 1043456
    %v30 = vsel %vm28, %v23, 0
    %32 = vmatprep.subr.bf16.mxu0 0
    %33 = vmatpush1.bf16.msra.mxu0 %v30
    %34 = vmatprep.subr.bf16.mxu0 0
    %35 = vmatpush1.bf16.msra.mxu0 0
    %36 = vmatprep.subr.bf16.mxu0 0
    %37 = vmatpush1.bf16.msra.mxu0 0
    %38 = vmatprep.subr.bf16.mxu0 0
    %39 = vmatpush1.bf16.msra.mxu0 0
    %40 = vmatprep.subr.bf16.mxu0 0
    %41 = vmatpush1.bf16.msra.mxu0 0
    %42 = vmatprep.subr.bf16.mxu0 0
    %43 = vmatpush1.bf16.msra.mxu0 0
    %44 = vmatprep.subr.bf16.mxu0 0
    %45 = vmatpush1.bf16.msra.mxu0 0
    %46 = vmatprep.subr.bf16.mxu0 0
    %47 = vmatpush1.bf16.msra.mxu0 0
    %48 = vmatprep.subr.bf16.mxu0 0
    %49 = vmatpush1.bf16.msra.mxu0 0
    %50 = vmatprep.subr.bf16.mxu0 0
    %51 = vmatpush1.bf16.msra.mxu0 0
    %52 = vmatprep.subr.bf16.mxu0 0
    %53 = vmatpush1.bf16.msra.mxu0 0
    %54 = vmatprep.subr.bf16.mxu0 0
    %55 = vmatpush1.bf16.msra.mxu0 0
    %56 = vmatprep.subr.bf16.mxu0 0
    %57 = vmatpush1.bf16.msra.mxu0 0
    %58 = vmatprep.subr.bf16.mxu0 0
    %59 = vmatpush1.bf16.msra.mxu0 0
    %60 = vmatprep.subr.bf16.mxu0 0
    %61 = vmatpush1.bf16.msra.mxu0 0
    %62 = vmatprep.subr.bf16.mxu0 0
    %63 = vmatpush1.bf16.msra.mxu0 0
    %64 = vmatprep.mubr.bf16.mxu0 0
    %65 = vmatmul.mubr.bf16.gmra.mrb[0].mxu0 %v26
    %v66 = vpop.f32.mrb[0].mxu0
    %v67 = vadd.f32 0.0, %v66
    %v68 = vpop.f32.mrb[0].mxu0
    %v69 = vpop.f32.mrb[0].mxu0
    %v70 = vadd.f32 0.0, %v69
    %v71 = vpop.f32.mrb[0].mxu0
    %72 = vdwg.mxu0
    %v73 = vpack.c.bf16 %v70, %v67
    %v74 = vld [vmem:[%s2] sm:$0xf]
    %v75 = vld [vmem:[%s2 + $0x4] sm:$0xf]
    %v76 = vld [vmem:[%s2 + $0x8] sm:$0xf]
    %v77 = vld [vmem:[%s2 + $0xc] sm:$0xf]
    %v78 = vld [vmem:[%s2 + $0x10] sm:$0xf]
    %v79 = vld [vmem:[%s2 + $0x14] sm:$0xf]
    %v80 = vld [vmem:[%s2 + $0x18] sm:$0xf]
    %v81 = vld [vmem:[%s2 + $0x1c] sm:$0xf]
    %v90 = vunpack.c.l.b16 %v74
    %v91 = vunpack.c.l.b16 %v75
    %v92 = vunpack.c.l.b16 %v76
    %v93 = vunpack.c.l.b16 %v77
    %v94 = vunpack.c.l.b16 %v78
    %v95 = vunpack.c.l.b16 %v79
    %v96 = vunpack.c.l.b16 %v80
    %v97 = vunpack.c.l.b16 %v81
    %v98 = vpack.c.b16 %v91, %v90
    %v99 = vpack.c.b16 %v93, %v92
    %v100 = vpack.c.b16 %v95, %v94
    %v101 = vpack.c.b16 %v97, %v96
    %vm106 = vcmask 523264
    %v108 = vsel %vm106, %v73, 0
    %110 = vmatprep.subr.bf16.mxu0 0
    %111 = vmatpush1.bf16.msra.mxu0 %v98
    %112 = vmatprep.subr.bf16.mxu0 0
    %113 = vmatpush1.bf16.msra.mxu0 %v99
    %114 = vmatprep.subr.bf16.mxu0 0
    %115 = vmatpush1.bf16.msra.mxu0 %v100
    %116 = vmatprep.subr.bf16.mxu0 0
    %117 = vmatpush1.bf16.msra.mxu0 %v101
    %118 = vmatprep.subr.bf16.mxu0 0
    %119 = vmatpush1.bf16.msra.mxu0 0
    %120 = vmatprep.subr.bf16.mxu0 0
    %121 = vmatpush1.bf16.msra.mxu0 0
    %122 = vmatprep.subr.bf16.mxu0 0
    %123 = vmatpush1.bf16.msra.mxu0 0
    %124 = vmatprep.subr.bf16.mxu0 0
    %125 = vmatpush1.bf16.msra.mxu0 0
    %126 = vmatprep.subr.bf16.mxu0 0
    %127 = vmatpush1.bf16.msra.mxu0 0
    %128 = vmatprep.subr.bf16.mxu0 0
    %129 = vmatpush1.bf16.msra.mxu0 0
    %130 = vmatprep.subr.bf16.mxu0 0
    %131 = vmatpush1.bf16.msra.mxu0 0
    %132 = vmatprep.subr.bf16.mxu0 0
    %133 = vmatpush1.bf16.msra.mxu0 0
    %134 = vmatprep.subr.bf16.mxu0 0
    %135 = vmatpush1.bf16.msra.mxu0 0
    %136 = vmatprep.subr.bf16.mxu0 0
    %137 = vmatpush1.bf16.msra.mxu0 0
    %138 = vmatprep.subr.bf16.mxu0 0
    %139 = vmatpush1.bf16.msra.mxu0 0
    %140 = vmatprep.subr.bf16.mxu0 0
    %141 = vmatpush1.bf16.msra.mxu0 0
    %142 = vmatprep.mubr.bf16.mxu0 0
    %143 = vmatmul.mubr.bf16.gmra.mrb[0].mxu0 %v108
    %v144 = vpop.f32.mrb[0].mxu0
    %v145 = vadd.f32 0.0, %v144
    %v146 = vpop.f32.mrb[0].mxu0
    %v147 = vpop.f32.mrb[0].mxu0
    %v148 = vadd.f32 0.0, %v147
    %v149 = vpop.f32.mrb[0].mxu0
    %150 = vdwg.mxu0
    %v152 = vunpack.c.l.b16 %v73
    %v153 = vunpack.c.h.b16 %v73
    %v154 = vpack.c.b16 %v152, %v152
    %v155 = vpack.c.b16 %v153, %v153
    %vm158 = vcmask 519168
    %159 = vst.msk [vmem:[#allocation2] sm:$0xf] %vm158, %v154
    %160 = vst.msk [vmem:[#allocation2 + $0x4] sm:$0xf] %vm158, %v155
    %vm161 = vcmask 130048
    %162 = vst.msk [vmem:[#allocation4] sm:$0xff] %vm161, %v145
    %163 = vst.msk [vmem:[#allocation4 + $0x8] sm:$0xff] %vm161, %v148
    // Predicated region
    $region14: #{tpu_custom_call.1} parent=1 // pred_check
      _
    $region15: #{tpu_custom_call.1} parent=1 // pred_check_branch
      %165 = sbr.rel (0) target = $region17
    $region16: #{tpu_custom_call.1} parent=1 // pred_region
      %s167 = ssub.s32 128, 128
      %168 = vsyncadd [#allocation3], %s167
      %s169 = sshll.u32 [#allocation2], 4
      %s170 = int_to_ptr.vmem [resolvable:$true] %s169
      %175 = dma.vmem_to_hbm [thread:$0]  %s170, 128, %s3, [#allocation3], 64, 64, 4
    $region17: #{tpu_custom_call.1} parent=1 // pred_fallthru
      _
    // Predicated region
    $region18: #{tpu_custom_call.1} parent=1 // pred_check
      _
    $region19: #{tpu_custom_call.1} parent=1 // pred_check_branch
      %177 = sbr.rel (0) target = $region21
    $region20: #{tpu_custom_call.1} parent=1 // pred_region
      %s179 = ssub.s32 256, 256
      %180 = vsyncadd [#allocation5], %s179
      %s181 = sshll.u32 [#allocation4], 4
      %s182 = int_to_ptr.vmem [resolvable:$true] %s181
      %187 = dma.vmem_to_hbm [thread:$0]  %s182, 256, %s4, [#allocation5], 128, 128, 8
    $region21: #{tpu_custom_call.1} parent=1 // pred_fallthru
      _
    // Predicated region
    $region22: #{tpu_custom_call.1} parent=1 // pred_check
      _
    $region23: #{tpu_custom_call.1} parent=1 // pred_check_branch
      %189 = sbr.rel (0) target = $region25
    $region24: #{tpu_custom_call.1} parent=1 // pred_region
      %190 = dma.done [#allocation3], 128
    $region25: #{tpu_custom_call.1} parent=1 // pred_fallthru
      _
    // Predicated region
    $region26: #{tpu_custom_call.1} parent=1 // pred_check
      _
    $region27: #{tpu_custom_call.1} parent=1 // pred_check_branch
      %192 = sbr.rel (0) target = $region29
    $region28: #{tpu_custom_call.1} parent=1 // pred_region
      %193 = dma.done [#allocation5], 256
    $region29: #{tpu_custom_call.1} parent=1 // pred_fallthru
      _
    %194 = vsyncpa [#allocation3], 1
    %195 = vsyncpa [#allocation5], 1

</llo_original>
